<compile_context>
chip_gen: v6e
topology: v6e:2x2x1
jax: 0.10.0
libtpu: 0.0.40
codegen_flags: <defaults>
</compile_context>

<pallas_src>
import jax
import jax.numpy as jnp
from jax.experimental import pallas as pl
from jax.experimental.pallas import tpu as pltpu

EPS = 1e-5  # nn.LayerNorm default


def _round_up(v, m):
    return ((v + m - 1) // m) * m


def _vmem_capacity_bytes():
    try:
        info = pltpu.get_tpu_info()
        cap = getattr(info, "vmem_capacity_bytes", None)
        if cap:
            return int(cap)
    except Exception:
        pass
    return 64 * 2**20  # conservative default (v7x)


def prenorm_linear_resident_kernel(x_ref, gamma_ref, beta_ref, w_ref, bias_ref,
                                   o_ref):
    # x_ref: (TN, D), gamma/beta: (1, D) f32, w_ref: (D, H) resident,
    # bias_ref: (1, H) f32, o_ref: (TN, H)
    x = x_ref[...].astype(jnp.float32)
    mean = jnp.mean(x, axis=-1, keepdims=True)
    centered = x - mean
    var = jnp.mean(centered * centered, axis=-1, keepdims=True)
    y = centered * jax.lax.rsqrt(var + EPS) * gamma_ref[...] + beta_ref[...]
    out = jnp.dot(y.astype(w_ref.dtype), w_ref[...],
                  preferred_element_type=jnp.float32)
    o_ref[...] = (out + bias_ref[...]).astype(o_ref.dtype)


def prenorm_linear_stream_kernel(x_ref, gamma_ref, beta_ref, w_ref, bias_ref,
                                 o_ref, y_ref):
    # Streaming-W path: LayerNorm is computed once per row tile (j == 0) into
    # the y_ref VMEM scratch (already in w.dtype) and reused for later column
    # tiles of W.
    @pl.when(pl.program_id(1) == 0)
    def _():
        x = x_ref[...].astype(jnp.float32)
        mean = jnp.mean(x, axis=-1, keepdims=True)
        centered = x - mean
        var = jnp.mean(centered * centered, axis=-1, keepdims=True)
        y = centered * jax.lax.rsqrt(var + EPS) * gamma_ref[...] + beta_ref[...]
        y_ref[...] = y.astype(y_ref.dtype)

    out = jnp.dot(y_ref[...], w_ref[...], preferred_element_type=jnp.float32)
    o_ref[...] = (out + bias_ref[...]).astype(o_ref.dtype)


def prenorm_linear(x, gamma, beta, w, bias, *, tn=None, th=512,
                   out_dtype=None, force_stream=False):
    """x: (B, S, D) -> (B, S, H)   out = Linear(LayerNorm(x))."""
    B, S, D = x.shape
    H = w.shape[1]
    N = B * S
    out_dtype = jnp.dtype(out_dtype if out_dtype is not None else x.dtype)
    xb = x.dtype.itemsize
    wb = w.dtype.itemsize
    ob = out_dtype.itemsize

    cap = _vmem_capacity_bytes()
    budget = int(cap * 0.70)  # headroom below physical VMEM

    # --- W residency decision (per-generation threshold) -------------------
    w_bytes = D * H * wb
    resident_cap = (20 * 2**20) if cap <= 64 * 2**20 else (48 * 2**20)
    w_resident = (not force_stream) and (w_bytes <= resident_cap)

    # --- row tile: generation-scaled default, multiple of 8 sublanes -------
    if tn is None:
        tn = 512 if cap > 64 * 2**20 else 256
    TN = max(8, min(_round_up(tn, 8), _round_up(N, 8)))

    # --- output-feature tile ------------------------------------------------
    if w_resident:
        TH = H
    else:
        if H % 128 == 0:
            TH = max(128, min((th // 128) * 128, H))
            while H % TH:
                TH -= 128
        else:
            TH = H  # full-dim block is always legal

    def vmem_need(tn_):
        fixed = 2 * (2 * D * 4 + TH * 4)            # gamma/beta/bias (f32)
        ln_tmp = 3 * tn_ * D * 4 + tn_ * TH * 4     # f32 LN temporaries + acc
        if w_resident:
            return (2 * tn_ * D * xb + 2 * tn_ * H * ob
                    + 2 * D * H * wb + ln_tmp + fixed)
        return (2 * tn_ * D * xb + 2 * tn_ * TH * ob
                + 3 * D * TH * wb + tn_ * D * wb + ln_tmp + fixed)

    while TN > 8 and vmem_need(TN) > budget:
        TN = max(8, _round_up(TN // 2, 8))

    n_row_tiles = (N + TN - 1) // TN
    vmem_limit = int(min(budget, max(16 * 2**20, int(vmem_need(TN) * 1.25))))

    x2 = x.reshape(N, D)
    gamma2 = gamma.reshape(1, D).astype(jnp.float32)
    beta2 = beta.reshape(1, D).astype(jnp.float32)
    bias2 = bias.reshape(1, H).astype(jnp.float32)

    if w_resident:
        grid = (n_row_tiles,)
        in_specs = [
            pl.BlockSpec((TN, D), lambda i: (i, 0)),
            pl.BlockSpec((1, D), lambda i: (0, 0)),
            pl.BlockSpec((1, D), lambda i: (0, 0)),
            pl.BlockSpec((D, H), lambda i: (0, 0)),   # resident: DMA'd once
            pl.BlockSpec((1, H), lambda i: (0, 0)),
        ]
        out_specs = pl.BlockSpec((TN, H), lambda i: (i, 0))
        scratch_shapes = []
        kernel = prenorm_linear_resident_kernel
        semantics = ("parallel",)
        w_traffic = D * H * wb
    else:
        grid = (n_row_tiles, H // TH)
        in_specs = [
            pl.BlockSpec((TN, D), lambda i, j: (i, 0)),
            pl.BlockSpec((1, D), lambda i, j: (0, 0)),
            pl.BlockSpec((1, D), lambda i, j: (0, 0)),
            pl.BlockSpec((D, TH), lambda i, j: (0, j),
                         pipeline_mode=pl.Buffered(3)),
            pl.BlockSpec((1, TH), lambda i, j: (0, j)),
        ]
        out_specs = pl.BlockSpec((TN, TH), lambda i, j: (i, j))
        scratch_shapes = [pltpu.VMEM((TN, D), w.dtype)]  # hoisted LN result
        kernel = prenorm_linear_stream_kernel
        semantics = ("parallel", "arbitrary")
        w_traffic = n_row_tiles * D * H * wb  # W re-read once per row tile

    cost = pl.CostEstimate(
        flops=2 * N * D * H + 6 * N * D,
        transcendentals=N,  # one rsqrt per row (hoisted in both paths)
        bytes_accessed=int(N * D * xb + w_traffic + N * H * ob
                           + (2 * D + H) * 4),
    )

    out2 = pl.pallas_call(
        kernel,
        out_shape=jax.ShapeDtypeStruct((N, H), out_dtype),
        grid_spec=pltpu.PrefetchScalarGridSpec(
            num_scalar_prefetch=0,
            grid=grid,
            in_specs=in_specs,
            out_specs=out_specs,
            scratch_shapes=scratch_shapes,
        ),
        compiler_params=pltpu.CompilerParams(
            dimension_semantics=semantics,
            vmem_limit_bytes=vmem_limit),
        cost_estimate=cost,
    )(x2, gamma2, beta2, w, bias2)
    return out2.reshape(B, S, H)


if __name__ == "__main__":
    # Small shapes consistent with PreNorm(dim, fn): batch=2, seq=32, dim=128,
    # fn = Linear(128 -> 256).  tn=16 makes the demo exercise a real
    # multi-step grid on both code paths.
    B, S, D, H = 2, 32, 128, 256

    key = jax.random.PRNGKey(0)
    kx, kw, kb = jax.random.split(key, 3)

    x = jax.random.normal(kx, (B, S, D), dtype=jnp.float32)

    # LayerNorm params: PyTorch default init (weight=1, bias=0).
    gamma = jnp.ones((D,), dtype=jnp.float32)
    beta = jnp.zeros((D,), dtype=jnp.float32)

    # fn = Linear(D, H): deterministic synthetic weights.
    # (Pass bf16 W in production for full MXU rate; f32 here to match ref.)
    w = jax.random.normal(kw, (D, H), dtype=jnp.float32) * (1.0 / (D ** 0.5))
    bias = jax.random.normal(kb, (H,), dtype=jnp.float32) * 0.01

    # Pure-JAX reference (LayerNorm then Linear).
    mean = jnp.mean(x, axis=-1, keepdims=True)
    var = jnp.mean((x - mean) ** 2, axis=-1, keepdims=True)
    ref = (x - mean) / jnp.sqrt(var + EPS) * gamma + beta
    ref = ref @ w + bias

    # Path 1: W resident in VMEM, single row-tiled grid axis (grid = (4,)).
    out_res = prenorm_linear(x, gamma, beta, w, bias, tn=16)
    out_res = jax.block_until_ready(out_res)
    assert jnp.allclose(out_res, ref, atol=1e-3, rtol=1e-3), "resident mismatch"

    # Path 2: streamed W + hoisted-LayerNorm scratch (grid = (4, 2)),
    # exercised explicitly so both kernels compile and run.
    out_str = prenorm_linear(x, gamma, beta, w, bias, tn=16, th=128,
                             force_stream=True)
    out_str = jax.block_until_ready(out_str)
    assert jnp.allclose(out_str, ref, atol=1e-3, rtol=1e-3), "stream mismatch"

    print("KERNEL_OK")
</pallas_src>

<mosaic_0001>
module attributes {stable_mosaic.version = 11 : i64} {
  func.func @prenorm_linear_resident_kernel(%arg0: i32, %arg1: memref<16x128xf32, #tpu.memory_space<vmem>>, %arg2: memref<1x128xf32, #tpu.memory_space<vmem>>, %arg3: memref<1x128xf32, #tpu.memory_space<vmem>>, %arg4: memref<128x256xf32, #tpu.memory_space<vmem>>, %arg5: memref<1x256xf32, #tpu.memory_space<vmem>>, %arg6: memref<16x256xf32, #tpu.memory_space<vmem>>) attributes {dimension_semantics = [#tpu.dimension_semantics<parallel>], iteration_bounds = array<i64: 4>, scalar_prefetch = 0 : i64, scratch_operands = 0 : i64, tpu.core_type = #tpu.core_type<tc>, window_params = [{transform_indices = @transform_0, window_bounds = array<i64: 16, 128>}, {pipeline_mode = #tpu.pipeline_mode<synchronous>, transform_indices = @transform_1, window_bounds = array<i64: 1, 128>}, {pipeline_mode = #tpu.pipeline_mode<synchronous>, transform_indices = @transform_2, window_bounds = array<i64: 1, 128>}, {pipeline_mode = #tpu.pipeline_mode<synchronous>, transform_indices = @transform_3, window_bounds = array<i64: 128, 256>}, {pipeline_mode = #tpu.pipeline_mode<synchronous>, transform_indices = @transform_4, window_bounds = array<i64: 1, 256>}, {transform_indices = @transform_5, window_bounds = array<i64: 16, 256>}]} {
    %c0 = arith.constant 0 : index
    %c0_0 = arith.constant 0 : index
    %0 = vector.load %arg1[%c0, %c0_0] : memref<16x128xf32, #tpu.memory_space<vmem>>, vector<16x128xf32>
    %cst = arith.constant dense<0.000000e+00> : vector<16xf32>
    %1 = vector.multi_reduction <add>, %0, %cst [1] : vector<16x128xf32> to vector<16xf32>
    %2 = vector.shape_cast %1 : vector<16xf32> to vector<16x1xf32>
    %cst_1 = arith.constant 1.280000e+02 : f32
    %3 = vector.broadcast %cst_1 : f32 to vector<16x1xf32>
    %4 = arith.divf %2, %3 : vector<16x1xf32>
    %5 = vector.broadcast %4 : vector<16x1xf32> to vector<16x128xf32>
    %6 = arith.subf %0, %5 : vector<16x128xf32>
    %7 = arith.mulf %6, %6 : vector<16x128xf32>
    %cst_2 = arith.constant dense<0.000000e+00> : vector<16xf32>
    %8 = vector.multi_reduction <add>, %7, %cst_2 [1] : vector<16x128xf32> to vector<16xf32>
    %9 = vector.shape_cast %8 : vector<16xf32> to vector<16x1xf32>
    %cst_3 = arith.constant 1.280000e+02 : f32
    %10 = vector.broadcast %cst_3 : f32 to vector<16x1xf32>
    %11 = arith.divf %9, %10 : vector<16x1xf32>
    %cst_4 = arith.constant 9.99999974E-6 : f32
    %12 = vector.broadcast %cst_4 : f32 to vector<16x1xf32>
    %13 = arith.addf %11, %12 : vector<16x1xf32>
    %14 = math.rsqrt %13 : vector<16x1xf32>
    %15 = vector.broadcast %14 : vector<16x1xf32> to vector<16x128xf32>
    %16 = arith.mulf %6, %15 : vector<16x128xf32>
    %c0_5 = arith.constant 0 : index
    %c0_6 = arith.constant 0 : index
    %17 = vector.load %arg2[%c0_5, %c0_6] : memref<1x128xf32, #tpu.memory_space<vmem>>, vector<1x128xf32>
    %18 = vector.broadcast %17 : vector<1x128xf32> to vector<16x128xf32>
    %19 = arith.mulf %16, %18 : vector<16x128xf32>
    %c0_7 = arith.constant 0 : index
    %c0_8 = arith.constant 0 : index
    %20 = vector.load %arg3[%c0_7, %c0_8] : memref<1x128xf32, #tpu.memory_space<vmem>>, vector<1x128xf32>
    %21 = vector.broadcast %20 : vector<1x128xf32> to vector<16x128xf32>
    %22 = arith.addf %19, %21 : vector<16x128xf32>
    %c0_9 = arith.constant 0 : index
    %c0_10 = arith.constant 0 : index
    %23 = vector.load %arg4[%c0_9, %c0_10] : memref<128x256xf32, #tpu.memory_space<vmem>>, vector<128x256xf32>
    %cst_11 = arith.constant dense<0.000000e+00> : vector<16x256xf32>
    %24 = tpu.matmul %22, %23, %cst_11 {dimension_numbers = #tpu.dot_dimension_numbers<[1], [0], [0], [1], [0, 0, 1, 1], [], []>} : vector<16x128xf32>, vector<128x256xf32>, vector<16x256xf32> -> vector<16x256xf32>
    %c0_12 = arith.constant 0 : index
    %c0_13 = arith.constant 0 : index
    %25 = vector.load %arg5[%c0_12, %c0_13] : memref<1x256xf32, #tpu.memory_space<vmem>>, vector<1x256xf32>
    %26 = vector.broadcast %25 : vector<1x256xf32> to vector<16x256xf32>
    %27 = arith.addf %24, %26 : vector<16x256xf32>
    %c0_14 = arith.constant 0 : index
    %c0_15 = arith.constant 0 : index
    %28 = vector.load %arg6[%c0_14, %c0_15] : memref<16x256xf32, #tpu.memory_space<vmem>>, vector<16x256xf32>
    tpu.vector_store %arg6[%c0_14, %c0_15], %27 {strides = array<i32>} : memref<16x256xf32, #tpu.memory_space<vmem>>, vector<16x256xf32>,
    return
  }
  func.func @transform_0(%arg0: i32) -> (i32, i32) {
    %c0_i32 = arith.constant 0 : i32
    %c0_i32_0 = arith.constant 0 : i32
    return %arg0, %c0_i32 : i32, i32
  }
  func.func @transform_1(%arg0: i32) -> (i32, i32) {
    %c0_i32 = arith.constant 0 : i32
    %c0_i32_0 = arith.constant 0 : i32
    %c0_i32_1 = arith.constant 0 : i32
    return %c0_i32, %c0_i32_0 : i32, i32
  }
  func.func @transform_2(%arg0: i32) -> (i32, i32) {
    %c0_i32 = arith.constant 0 : i32
    %c0_i32_0 = arith.constant 0 : i32
    %c0_i32_1 = arith.constant 0 : i32
    return %c0_i32, %c0_i32_0 : i32, i32
  }
  func.func @transform_3(%arg0: i32) -> (i32, i32) {
    %c0_i32 = arith.constant 0 : i32
    %c0_i32_0 = arith.constant 0 : i32
    %c0_i32_1 = arith.constant 0 : i32
    return %c0_i32, %c0_i32_0 : i32, i32
  }
  func.func @transform_4(%arg0: i32) -> (i32, i32) {
    %c0_i32 = arith.constant 0 : i32
    %c0_i32_0 = arith.constant 0 : i32
    %c0_i32_1 = arith.constant 0 : i32
    return %c0_i32, %c0_i32_0 : i32, i32
  }
  func.func @transform_5(%arg0: i32) -> (i32, i32) {
    %c0_i32 = arith.constant 0 : i32
    %c0_i32_0 = arith.constant 0 : i32
    return %arg0, %c0_i32 : i32, i32
  }
}

</mosaic_0001>

<llo_original>
// kernel: tpu_custom_call.1
$region0: #{tpu_custom_call.1}
  #allocation0 [shape = 'u32[]', space=smem, size = 0x4, offset = 0x4, fixed_abs, tag = 'smem constant byte address 0x4 - core index']
  #allocation1 [shape = 'u32[144,128]{1,0:T(1,128)}', space=vmem, size = 0x12000, scoped, tag = 'internal scratch']
  %s0 = inlined_call_operand.hbm [shape: f32[64,128], index: 0, kind: input, shape index: {}]
  %s1 = inlined_call_operand.vmem [shape: f32[1,128], index: 1, kind: input, shape index: {}]
  %s2 = inlined_call_operand.hbm [shape: f32[1,128], index: 2, kind: input, shape index: {}]
  %s3 = inlined_call_operand.hbm [shape: f32[128,256], index: 3, kind: input, shape index: {}]
  %s4 = inlined_call_operand.vmem [shape: f32[1,256], index: 4, kind: input, shape index: {}]
  %s5 = inlined_call_operand.hbm [shape: f32[64,256], index: 5, kind: output, shape index: {}]
  %s6 = sld [smem:[#allocation0]]
  $region65: #{tpu_custom_call.1} parent=0
    _
  %s8 = ssub.s32 1, %s6
  %s9 = scalar_select 0, %s8, %s6
  $region1: #{tpu_custom_call.1} parent=0
    #allocation2 [shape = 'u8[16384]{0}', space=vmem, size = 0x4000, scoped, tag = 'input window, operand 0']
    #allocation3 [shape = 's32[2]{0}', space=sflag, size = 0x8, scoped, tag = 'scoped memory for tpu_custom_call.1']
    #allocation4 [shape = 's32[2]{0}', space=sflag, size = 0x8, scoped, tag = 'scoped memory for tpu_custom_call.1']
    #allocation5 [shape = 'u8[512]{0}', space=vmem, size = 0x400, scoped, tag = 'input window, operand 2, single buffered']
    #allocation6 [shape = 's32[1]{0}', space=sflag, size = 0x4, scoped, tag = 'scoped memory for tpu_custom_call.1']
    #allocation7 [shape = 'u8[131072]{0}', space=vmem, size = 0x20000, scoped, tag = 'input window, operand 3, single buffered']
    #allocation8 [shape = 'u8[32768]{0}', space=vmem, size = 0x8000, scoped, tag = 'output window, operand 0']
    %10 = vsyncpa [#allocation3], 0
    %s11 = scalar_lea.sflag [#allocation3], 1
    %12 = vsyncpa %s11, 0
    %13 = vsyncpa [#allocation6], 0
    %14 = vsyncpa [#allocation4], 0
    %s15 = scalar_lea.sflag [#allocation4], 1
    %16 = vsyncpa %s15, 0
    loop: start=0, step=1, limit=6
    $region2: #{tpu_custom_call.1} parent=1 // loop_pre_header
      _
    $region3: #{tpu_custom_call.1} parent=1 // loop_header
      %s18 = sphi 0, %s22
      %p19 = scmp.ge.s32.totalorder %s18, 6
      %s28 = sphi 0, %s30
      %s31 = sphi 0, %s28
      %s32 = sphi 0, %s31
      %s48 = sphi 0, %s32
      %s52 = sphi 0, %s52
      %s54 = sphi 0, %s52
      %s55 = sphi 0, %s54
      %s69 = sphi 0, %s55
      %s73 = sphi 0, %s73
      %s75 = sphi 0, %s73
      %s76 = sphi 0, %s75
      %s90 = sphi 0, %s76
      %s94 = sphi 0, %s94
      %s96 = sphi 0, %s94
      %s97 = sphi 0, %s96
      %s111 = sphi 0, %s97
      %s115 = sphi 0, %s115
      %s117 = sphi 0, %s115
      %s118 = sphi 0, %s117
      %s132 = sphi 0, %s118
      %s138 = sphi 0, %s140
      %s141 = sphi 0, %s138
      %s142 = sphi 0, %s141
      %s158 = sphi 0, %s142
    $region4: #{tpu_custom_call.1} parent=1 // loop_header_branch
      %21 = sbr.rel (%p19) target = $region8
    $region5: #{tpu_custom_call.1} parent=1 // loop_body
      %s23 = ssub.s32 %s18, 1
      %s24 = ssub.s32 %s18, 2
      %s25 = sadd.s32 %s18, 1
      %s26 = ssub.s32 %s18, %s25
      %p27 = scmp.eq.s32.totalorder %s26, 0
      %s29 = sadd.s32 %s28, 1
      %s30 = scalar_select %p27, %s28, %s29
      %p33 = pneg %p27
      %p34 = scmp.eq.s32.totalorder %s18, 3
      %p35 = por %p33, %p34
      %p36 = scmp.ne.s32.totalorder %s28, %s31
      %p37 = scmp.eq.s32.totalorder %s18, 0
      %p38 = por %p36, %p37
      %p39 = scmp.ne.s32.totalorder %s28, %s31
      %p40 = scmp.eq.s32.totalorder %s23, 3
      %p41 = por %p39, %p40
      %p42 = scmp.ne.s32.totalorder %s31, %s32
      %p43 = scmp.eq.s32.totalorder %s23, 0
      %p44 = por %p42, %p43
      %p45 = scmp.ne.s32.totalorder %s31, %s32
      %p46 = scmp.eq.s32.totalorder %s24, 3
      %p47 = por %p45, %p46
      %p49 = scmp.ne.s32.totalorder %s32, %s48
      %p50 = scmp.eq.s32.totalorder %s24, 0
      %p51 = por %p49, %p50
      %s53 = sadd.s32 %s52, 1
      %p56 = scmp.eq.s32.totalorder %s18, 3
      %p57 = scmp.ne.s32.totalorder %s52, %s54
      %p58 = scmp.eq.s32.totalorder %s18, 0
      %p59 = por %p57, %p58
      %p60 = scmp.ne.s32.totalorder %s52, %s54
      %p61 = scmp.eq.s32.totalorder %s23, 3
      %p62 = por %p60, %p61
      %p63 = scmp.ne.s32.totalorder %s54, %s55
      %p64 = scmp.eq.s32.totalorder %s23, 0
      %p65 = por %p63, %p64
      %p66 = scmp.ne.s32.totalorder %s54, %s55
      %p67 = scmp.eq.s32.totalorder %s24, 3
      %p68 = por %p66, %p67
      %p70 = scmp.ne.s32.totalorder %s55, %s69
      %p71 = scmp.eq.s32.totalorder %s24, 0
      %p72 = por %p70, %p71
      %s74 = sadd.s32 %s73, 1
      %p77 = scmp.eq.s32.totalorder %s18, 3
      %p78 = scmp.ne.s32.totalorder %s73, %s75
      %p79 = scmp.eq.s32.totalorder %s18, 0
      %p80 = por %p78, %p79
      %p81 = scmp.ne.s32.totalorder %s73, %s75
      %p82 = scmp.eq.s32.totalorder %s23, 3
      %p83 = por %p81, %p82
      %p84 = scmp.ne.s32.totalorder %s75, %s76
      %p85 = scmp.eq.s32.totalorder %s23, 0
      %p86 = por %p84, %p85
      %p87 = scmp.ne.s32.totalorder %s75, %s76
      %p88 = scmp.eq.s32.totalorder %s24, 3
      %p89 = por %p87, %p88
      %p91 = scmp.ne.s32.totalorder %s76, %s90
      %p92 = scmp.eq.s32.totalorder %s24, 0
      %p93 = por %p91, %p92
      %s95 = sadd.s32 %s94, 1
      %p98 = scmp.eq.s32.totalorder %s18, 3
      %p99 = scmp.ne.s32.totalorder %s94, %s96
      %p100 = scmp.eq.s32.totalorder %s18, 0
      %p101 = por %p99, %p100
      %p102 = scmp.ne.s32.totalorder %s94, %s96
      %p103 = scmp.eq.s32.totalorder %s23, 3
      %p104 = por %p102, %p103
      %p105 = scmp.ne.s32.totalorder %s96, %s97
      %p106 = scmp.eq.s32.totalorder %s23, 0
      %p107 = por %p105, %p106
      %p108 = scmp.ne.s32.totalorder %s96, %s97
      %p109 = scmp.eq.s32.totalorder %s24, 3
      %p110 = por %p108, %p109
      %p112 = scmp.ne.s32.totalorder %s97, %s111
      %p113 = scmp.eq.s32.totalorder %s24, 0
      %p114 = por %p112, %p113
      %s116 = sadd.s32 %s115, 1
      %p119 = scmp.eq.s32.totalorder %s18, 3
      %p120 = scmp.ne.s32.totalorder %s115, %s117
      %p121 = scmp.eq.s32.totalorder %s18, 0
      %p122 = por %p120, %p121
      %p123 = scmp.ne.s32.totalorder %s115, %s117
      %p124 = scmp.eq.s32.totalorder %s23, 3
      %p125 = por %p123, %p124
      %p126 = scmp.ne.s32.totalorder %s117, %s118
      %p127 = scmp.eq.s32.totalorder %s23, 0
      %p128 = por %p126, %p127
      %p129 = scmp.ne.s32.totalorder %s117, %s118
      %p130 = scmp.eq.s32.totalorder %s24, 3
      %p131 = por %p129, %p130
      %p133 = scmp.ne.s32.totalorder %s118, %s132
      %p134 = scmp.eq.s32.totalorder %s24, 0
      %p135 = por %p133, %p134
      %s136 = ssub.s32 %s18, %s25
      %p137 = scmp.eq.s32.totalorder %s136, 0
      %s139 = sadd.s32 %s138, 1
      %s140 = scalar_select %p137, %s138, %s139
      %p143 = pneg %p137
      %p144 = scmp.eq.s32.totalorder %s18, 3
      %p145 = por %p143, %p144
      %p146 = scmp.ne.s32.totalorder %s138, %s141
      %p147 = scmp.eq.s32.totalorder %s18, 0
      %p148 = por %p146, %p147
      %p149 = scmp.ne.s32.totalorder %s138, %s141
      %p150 = scmp.eq.s32.totalorder %s23, 3
      %p151 = por %p149, %p150
      %p152 = scmp.ne.s32.totalorder %s141, %s142
      %p153 = scmp.eq.s32.totalorder %s23, 0
      %p154 = por %p152, %p153
      %p155 = scmp.ne.s32.totalorder %s141, %s142
      %p156 = scmp.eq.s32.totalorder %s24, 3
      %p157 = por %p155, %p156
      %p159 = scmp.ne.s32.totalorder %s142, %s158
      %p160 = scmp.eq.s32.totalorder %s24, 0
      %p161 = por %p159, %p160
      %p162 = scmp.le.s32.totalorder 1, %s18
      %p163 = scmp.lt.s32.totalorder %s18, 5
      %p164 = pnand %p162, %p163
      %p165 = pneg %p164
      // Predicated region
      $region9: #{tpu_custom_call.1} parent=5 // pred_check
        _
      $region10: #{tpu_custom_call.1} parent=5 // pred_check_branch
        %167 = sbr.rel (%p164) target = $region12
      $region11: #{tpu_custom_call.1} parent=5 // pred_region
        %s168 = ssub.s32 %s18, 1
        // Predicated region
        $region13: #{tpu_custom_call.1} parent=11 // pred_check
          %p169 = pneg %p65
        $region14: #{tpu_custom_call.1} parent=11 // pred_check_branch
          %171 = sbr.rel (%p169) target = $region16
        $region15: #{tpu_custom_call.1} parent=11 // pred_region
          _
        $region16: #{tpu_custom_call.1} parent=11 // pred_fallthru
          _
        // Predicated region
        $region17: #{tpu_custom_call.1} parent=11 // pred_check
          %p172 = pneg %p86
        $region18: #{tpu_custom_call.1} parent=11 // pred_check_branch
          %174 = sbr.rel (%p172) target = $region20
        $region19: #{tpu_custom_call.1} parent=11 // pred_region
          %s176 = ssub.s32 16, 16
          %177 = vsyncadd [#allocation6], %s176
          %s179 = sshll.u32 [#allocation5], 4
          %s180 = int_to_ptr.vmem [resolvable:$true] %s179
          %182 = dma.hbm_to_vmem [thread:$0]  %s2, 16, %s180, [#allocation6]
        $region20: #{tpu_custom_call.1} parent=11 // pred_fallthru
          _
        // Predicated region
        $region21: #{tpu_custom_call.1} parent=11 // pred_check
          %p183 = pneg %p107
        $region22: #{tpu_custom_call.1} parent=11 // pred_check_branch
          %185 = sbr.rel (%p183) target = $region24
        $region23: #{tpu_custom_call.1} parent=11 // pred_region
          %s187 = ssub.s32 4096, 4096
          %188 = vsyncadd [#allocation6], %s187
          %s189 = sshll.u32 [#allocation7], 4
          %s190 = int_to_ptr.vmem [resolvable:$true] %s189
          %195 = dma.hbm_to_vmem [thread:$0]  %s3, 4096, %s190, [#allocation6], 256, 256, 16
        $region24: #{tpu_custom_call.1} parent=11 // pred_fallthru
          _
        // Predicated region
        $region25: #{tpu_custom_call.1} parent=11 // pred_check
          %p196 = pneg %p128
        $region26: #{tpu_custom_call.1} parent=11 // pred_check_branch
          %198 = sbr.rel (%p196) target = $region28
        $region27: #{tpu_custom_call.1} parent=11 // pred_region
          _
        $region28: #{tpu_custom_call.1} parent=11 // pred_fallthru
          _
      $region12: #{tpu_custom_call.1} parent=5 // pred_fallthru
        _
      %p199 = scmp.lt.s32.totalorder %s18, 4
      // Predicated region
      $region29: #{tpu_custom_call.1} parent=5 // pred_check
        %p200 = pneg %p199
      $region30: #{tpu_custom_call.1} parent=5 // pred_check_branch
        %202 = sbr.rel (%p200) target = $region32
      $region31: #{tpu_custom_call.1} parent=5 // pred_region
        // Predicated region
        $region33: #{tpu_custom_call.1} parent=31 // pred_check
          %p203 = pneg %p38
        $region34: #{tpu_custom_call.1} parent=31 // pred_check_branch
          %205 = sbr.rel (%p203) target = $region36
        $region35: #{tpu_custom_call.1} parent=31 // pred_region
          %s206 = sand.u32 %s28, 1
          %s207 = scalar_lea.sflag [#allocation3], %s206
          %s208 = sand.u32 %s28, 1
          %s209 = smul.addr %s208, 16
          %s210 = scalar_lea.vmem [#allocation2], %s209
          %s211 = smul.u32 2, %s18
          %s213 = ssub.s32 256, 256
          %214 = vsyncadd %s207, %s213
          %s215 = smul.addr %s211, 128
          %s216 = scalar_lea.hbm %s0, %s215
          %s217 = sshll.u32 %s210, 4
          %s218 = int_to_ptr.vmem [resolvable:$true] %s217
          %223 = dma.hbm_to_vmem [thread:$0]  %s216, 256, %s218, %s207, 128, 128, 8
        $region36: #{tpu_custom_call.1} parent=31 // pred_fallthru
          _
      $region32: #{tpu_custom_call.1} parent=5 // pred_fallthru
        _
      %p224 = scmp.le.s32.totalorder 1, %s18
      %p225 = scmp.lt.s32.totalorder %s18, 5
      %p226 = pnand %p224, %p225
      %p227 = pneg %p226
      // Predicated region
      $region37: #{tpu_custom_call.1} parent=5 // pred_check
        _
      $region38: #{tpu_custom_call.1} parent=5 // pred_check_branch
        %229 = sbr.rel (%p226) target = $region40
      $region39: #{tpu_custom_call.1} parent=5 // pred_region
        %s230 = ssub.s32 %s18, 1
        %s231 = sand.u32 %s31, 1
        %s232 = scalar_lea.sflag [#allocation3], %s231
        %s233 = sand.u32 %s31, 1
        %s234 = smul.addr %s233, 16
        %s235 = scalar_lea.vmem [#allocation2], %s234
        // Predicated region
        $region41: #{tpu_custom_call.1} parent=39 // pred_check
          %p236 = pneg %p44
        $region42: #{tpu_custom_call.1} parent=39 // pred_check_branch
          %238 = sbr.rel (%p236) target = $region44
        $region43: #{tpu_custom_call.1} parent=39 // pred_region
          %239 = dma.done %s232, 256
        $region44: #{tpu_custom_call.1} parent=39 // pred_fallthru
          _
        // Predicated region
        $region45: #{tpu_custom_call.1} parent=39 // pred_check
          %p240 = pneg %p86
        $region46: #{tpu_custom_call.1} parent=39 // pred_check_branch
          %242 = sbr.rel (%p240) target = $region48
        $region47: #{tpu_custom_call.1} parent=39 // pred_region
          %243 = dma.done [#allocation6], 16
        $region48: #{tpu_custom_call.1} parent=39 // pred_fallthru
          _
        // Predicated region
        $region49: #{tpu_custom_call.1} parent=39 // pred_check
          %p244 = pneg %p107
        $region50: #{tpu_custom_call.1} parent=39 // pred_check_branch
          %246 = sbr.rel (%p244) target = $region52
        $region51: #{tpu_custom_call.1} parent=39 // pred_region
          %247 = dma.done [#allocation6], 4096
        $region52: #{tpu_custom_call.1} parent=39 // pred_fallthru
          _
        %s248 = sand.u32 %s31, 1
        %s249 = scalar_lea.sflag [#allocation3], %s248
        %s250 = sand.u32 %s31, 1
        %s251 = smul.addr %s250, 16
        %s252 = scalar_lea.vmem [#allocation2], %s251
        %p253 = pneg %p44
        %p254 = pneg %p41
        %p255 = pneg %p65
        %p256 = pneg %p62
        %p257 = pneg %p86
        %p258 = pneg %p83
        %p259 = pneg %p107
        %p260 = pneg %p104
        %p261 = pneg %p128
        %p262 = pneg %p125
        %p263 = pneg %p154
        %p264 = pneg %p151
        %s265 = sand.u32 %s141, 1
        %s266 = scalar_lea.sflag [#allocation4], %s265
        %s267 = sand.u32 %s141, 1
        %s268 = smul.addr %s267, 32
        %s269 = scalar_lea.vmem [#allocation8], %s268
        %s270 = smul.u32 2, %s23
        %s271 = smul.u32 2, %s23
        %v272 = vld [vmem:[%s235] sm:$0xff]
        %v273 = vld [vmem:[%s235 + $0x8] sm:$0xff]
        %274 = vadd.xlane.f32.xlu0 %v272
        %v275 = vpop.xlane.xlu0 %274
        %276 = vadd.xlane.f32.xlu0 %v273
        %v277 = vpop.xlane.xlu0 %276
        %v278 = vrcp.pop 128.0
        %v279 = vmul.f32 %v275, %v278
        %v280 = vmul.f32 %v277, %v278
        %v281 = vsub.f32 %v272, %v279
        %v282 = vsub.f32 %v273, %v280
        %v283 = vmul.f32 %v281, %v281
        %v284 = vmul.f32 %v282, %v282
        %285 = vadd.xlane.f32.xlu0 %v283
        %v286 = vpop.xlane.xlu0 %285
        %287 = vadd.xlane.f32.xlu0 %v284
        %v288 = vpop.xlane.xlu0 %287
        %v289 = vmul.f32 %v286, %v278
        %v290 = vmul.f32 %v288, %v278
        %v291 = vadd.f32 %v289, 1e-05
        %v292 = vadd.f32 %v290, 1e-05
        %v293 = vrsqrt.pop %v291
        %v294 = vrsqrt.pop %v292
        %v295 = vmul.f32 %v281, %v293
        %v296 = vmul.f32 %v282, %v294
        %v297 = vld [vmem:[%s1] sm:$0x1]
        %v299 = vlaneseq
        %v300 = vshrl.u32 %v299, 7
        %v301 = vsub.s32 0, %v300
        %v302 = vrot.slane %v297, %v301
        %v304 = vmul.f32 %v295, %v302
        %v305 = vmul.f32 %v296, %v302
        %v306 = vld [vmem:[#allocation5] sm:$0x1]
        %v308 = vlaneseq
        %v309 = vshrl.u32 %v308, 7
        %v310 = vsub.s32 0, %v309
        %v311 = vrot.slane %v306, %v310
        %v313 = vadd.f32 %v304, %v311
        %v314 = vadd.f32 %v305, %v311
        %v315 = vld [vmem:[#allocation7] sm:$0xff]
        %v316 = vld [vmem:[#allocation7 + $0x8] sm:$0xff]
        %v317 = vld [vmem:[#allocation7 + $0x10] sm:$0xff]
        %v318 = vld [vmem:[#allocation7 + $0x18] sm:$0xff]
        %v319 = vld [vmem:[#allocation7 + $0x20] sm:$0xff]
        %v320 = vld [vmem:[#allocation7 + $0x28] sm:$0xff]
        %v321 = vld [vmem:[#allocation7 + $0x30] sm:$0xff]
        %v322 = vld [vmem:[#allocation7 + $0x38] sm:$0xff]
        %v323 = vld [vmem:[#allocation7 + $0x40] sm:$0xff]
        %v324 = vld [vmem:[#allocation7 + $0x48] sm:$0xff]
        %v325 = vld [vmem:[#allocation7 + $0x50] sm:$0xff]
        %v326 = vld [vmem:[#allocation7 + $0x58] sm:$0xff]
        %v327 = vld [vmem:[#allocation7 + $0x60] sm:$0xff]
        %v328 = vld [vmem:[#allocation7 + $0x68] sm:$0xff]
        %v329 = vld [vmem:[#allocation7 + $0x70] sm:$0xff]
        %v330 = vld [vmem:[#allocation7 + $0x78] sm:$0xff]
        %v331 = vld [vmem:[#allocation7 + $0x80] sm:$0xff]
        %v332 = vld [vmem:[#allocation7 + $0x88] sm:$0xff]
        %v333 = vld [vmem:[#allocation7 + $0x90] sm:$0xff]
        %v334 = vld [vmem:[#allocation7 + $0x98] sm:$0xff]
        %v335 = vld [vmem:[#allocation7 + $0xa0] sm:$0xff]
        %v336 = vld [vmem:[#allocation7 + $0xa8] sm:$0xff]
        %v337 = vld [vmem:[#allocation7 + $0xb0] sm:$0xff]
        %v338 = vld [vmem:[#allocation7 + $0xb8] sm:$0xff]
        %v339 = vld [vmem:[#allocation7 + $0xc0] sm:$0xff]
        %v340 = vld [vmem:[#allocation7 + $0xc8] sm:$0xff]
        %v341 = vld [vmem:[#allocation7 + $0xd0] sm:$0xff]
        %v342 = vld [vmem:[#allocation7 + $0xd8] sm:$0xff]
        %v343 = vld [vmem:[#allocation7 + $0xe0] sm:$0xff]
        %v344 = vld [vmem:[#allocation7 + $0xe8] sm:$0xff]
        %v345 = vld [vmem:[#allocation7 + $0xf0] sm:$0xff]
        %v346 = vld [vmem:[#allocation7 + $0xf8] sm:$0xff]
        %v347 = vld [vmem:[%s4] sm:$0x3]
        %v349 = vlaneseq
        %v350 = vshrl.u32 %v349, 7
        %v351 = vsub.s32 0, %v350
        %v352 = vrot.slane %v347, %v351
        %v353 = vlaneseq
        %v354 = vshrl.u32 %v353, 7
        %v355 = vsub.s32 1, %v354
        %v356 = vrot.slane %v347, %v355
        %359 = vmatprep.subr.mxu0 %v346
        %360 = vmatpush1.msra.mxu0 %v345
        %361 = vmatprep.subr.mxu0 %v344
        %362 = vmatpush1.msra.mxu0 %v343
        %363 = vmatprep.subr.mxu0 %v342
        %364 = vmatpush1.msra.mxu0 %v341
        %365 = vmatprep.subr.mxu0 %v340
        %366 = vmatpush1.msra.mxu0 %v339
        %367 = vmatprep.subr.mxu0 %v338
        %368 = vmatpush1.msra.mxu0 %v337
        %369 = vmatprep.subr.mxu0 %v336
        %370 = vmatpush1.msra.mxu0 %v335
        %371 = vmatprep.subr.mxu0 %v334
        %372 = vmatpush1.msra.mxu0 %v333
        %373 = vmatprep.subr.mxu0 %v332
        %374 = vmatpush1.msra.mxu0 %v331
        %375 = vmatprep.subr.mxu0 %v330
        %376 = vmatpush1.msra.mxu0 %v329
        %377 = vmatprep.subr.mxu0 %v328
        %378 = vmatpush1.msra.mxu0 %v327
        %379 = vmatprep.subr.mxu0 %v326
        %380 = vmatpush1.msra.mxu0 %v325
        %381 = vmatprep.subr.mxu0 %v324
        %382 = vmatpush1.msra.mxu0 %v323
        %383 = vmatprep.subr.mxu0 %v322
        %384 = vmatpush1.msra.mxu0 %v321
        %385 = vmatprep.subr.mxu0 %v320
        %386 = vmatpush1.msra.mxu0 %v319
        %387 = vmatprep.subr.mxu0 %v318
        %388 = vmatpush1.msra.mxu0 %v317
        %389 = vmatprep.subr.mxu0 %v316
        %390 = vmatpush1.msra.mxu0 %v315
        %391 = vmatprep.subr.mxu0 0.0
        %392 = vmatpush2.msra.mxu0 0.0
        %393 = vmatprep.subr.mxu0 0.0
        %394 = vmatpush2.msra.mxu0 0.0
        %395 = vmatprep.subr.mxu0 0.0
        %396 = vmatpush2.msra.mxu0 0.0
        %397 = vmatprep.subr.mxu0 0.0
        %398 = vmatpush2.msra.mxu0 0.0
        %399 = vmatprep.subr.mxu0 0.0
        %400 = vmatpush2.msra.mxu0 0.0
        %401 = vmatprep.subr.mxu0 0.0
        %402 = vmatpush2.msra.mxu0 0.0
        %403 = vmatprep.subr.mxu0 0.0
        %404 = vmatpush2.msra.mxu0 0.0
        %405 = vmatprep.subr.mxu0 0.0
        %406 = vmatpush2.msra.mxu0 0.0
        %407 = vmatprep.subr.mxu0 0.0
        %408 = vmatpush2.msra.mxu0 0.0
        %409 = vmatprep.subr.mxu0 0.0
        %410 = vmatpush2.msra.mxu0 0.0
        %411 = vmatprep.subr.mxu0 0.0
        %412 = vmatpush2.msra.mxu0 0.0
        %413 = vmatprep.subr.mxu0 0.0
        %414 = vmatpush2.msra.mxu0 0.0
        %415 = vmatprep.subr.mxu0 0.0
        %416 = vmatpush2.msra.mxu0 0.0
        %417 = vmatprep.subr.mxu0 0.0
        %418 = vmatpush2.msra.mxu0 0.0
        %419 = vmatprep.subr.mxu0 0.0
        %420 = vmatpush2.msra.mxu0 0.0
        %421 = vmatprep.subr.mxu0 0.0
        %422 = vmatpush2.msra.mxu0 0.0
        %423 = vmatprep.mubr.f32.mxu0 0.0
        %424 = vmatmul.mubr.f32.gmra.mxu0 %v313
        %v425 = vpop.f32.mrf.mxu0
        %v426 = vadd.f32 %v352, %v425
        %v427 = vpop.f32.mrf.mxu0
        %v428 = vadd.f32 %v356, %v427
        %429 = vmatprep.mubr.f32.mxu0 0.0
        %430 = vmatmul.mubr.f32.gmra.mxu0 %v314
        %v431 = vpop.f32.mrf.mxu0
        %v432 = vadd.f32 %v352, %v431
        %v433 = vpop.f32.mrf.mxu0
        %v434 = vadd.f32 %v356, %v433
        %435 = vdwg.mxu0
        %436 = vst [vmem:[%s269] sm:$0xff] %v426
        %437 = vst [vmem:[%s269 + $0x8] sm:$0xff] %v428
        %438 = vst [vmem:[%s269 + $0x10] sm:$0xff] %v432
        %439 = vst [vmem:[%s269 + $0x18] sm:$0xff] %v434
        %s440 = sand.u32 %s141, 1
        %s441 = scalar_lea.sflag [#allocation4], %s440
        %s442 = sand.u32 %s141, 1
        %s443 = smul.addr %s442, 32
        %s444 = scalar_lea.vmem [#allocation8], %s443
        // Predicated region
        $region53: #{tpu_custom_call.1} parent=39 // pred_check
          %p445 = pneg %p151
        $region54: #{tpu_custom_call.1} parent=39 // pred_check_branch
          %447 = sbr.rel (%p445) target = $region56
        $region55: #{tpu_custom_call.1} parent=39 // pred_region
          %s448 = smul.u32 2, %s23
          %s450 = ssub.s32 512, 512
          %451 = vsyncadd %s441, %s450
          %s452 = smul.addr %s448, 2
          %s453 = smul.addr %s452, 128
          %s454 = scalar_lea.hbm %s5, %s453
          %s455 = sshll.u32 %s444, 4
          %s456 = int_to_ptr.vmem [resolvable:$true] %s455
          %461 = dma.vmem_to_hbm [thread:$0]  %s456, 512, %s454, %s441, 256, 256, 16
        $region56: #{tpu_custom_call.1} parent=39 // pred_fallthru
          _
      $region40: #{tpu_custom_call.1} parent=5 // pred_fallthru
        _
      %p462 = scmp.le.s32.totalorder 2, %s18
      // Predicated region
      $region57: #{tpu_custom_call.1} parent=5 // pred_check
        %p463 = pneg %p462
      $region58: #{tpu_custom_call.1} parent=5 // pred_check_branch
        %465 = sbr.rel (%p463) target = $region60
      $region59: #{tpu_custom_call.1} parent=5 // pred_region
        %s466 = ssub.s32 %s18, 2
        // Predicated region
        $region61: #{tpu_custom_call.1} parent=59 // pred_check
          %p467 = pneg %p157
        $region62: #{tpu_custom_call.1} parent=59 // pred_check_branch
          %469 = sbr.rel (%p467) target = $region64
        $region63: #{tpu_custom_call.1} parent=59 // pred_region
          %s470 = sand.u32 %s142, 1
          %s471 = scalar_lea.sflag [#allocation4], %s470
          %s472 = sand.u32 %s142, 1
          %s473 = smul.addr %s472, 32
          %s474 = scalar_lea.vmem [#allocation8], %s473
          %475 = dma.done %s471, 512
        $region64: #{tpu_custom_call.1} parent=59 // pred_fallthru
          _
      $region60: #{tpu_custom_call.1} parent=5 // pred_fallthru
        _
    $region6: #{tpu_custom_call.1} parent=1 // loop_footer
      %s22 = sadd.s32 1, %s18
    $region7: #{tpu_custom_call.1} parent=1 // loop_footer_branch
      %17 = sbr.rel target = $region3
    $region8: #{tpu_custom_call.1} parent=1 // loop_exit
      _
    %476 = vsyncpa [#allocation3], 1
    %s477 = scalar_lea.sflag [#allocation3], 1
    %478 = vsyncpa %s477, 1
    %479 = vsyncpa [#allocation6], 1
    %480 = vsyncpa [#allocation4], 1
    %s481 = scalar_lea.sflag [#allocation4], 1
    %482 = vsyncpa %s481, 1

</llo_original>
